<compile_context>
chip_gen: v6e
topology: v6e:2x2x1
jax: 0.10.0
libtpu: 0.0.40
codegen_flags: <defaults>
</compile_context>

<pallas_src>
from functools import partial

import numpy as np

import jax
import jax.numpy as jnp
from jax.experimental import pallas as pl
from jax.experimental.pallas import tpu as pltpu

# ---------------- hyper-parameters (small, deterministic) ----------------
VOCAB = 128          # vocab size (lane-friendly)
HIDDEN = 32          # hidden size
MAX_CONTEXT_LEN = 8  # window length the kernel is compiled for
STRIDE = 4
SEQ_LEN = 72         # -> 18 sliding windows -> 2 MXU-sized grid steps
IGNORE_INDEX = -100


# ---------------------------- Pallas kernel ------------------------------
def _ce_window_kernel(hidden_ref, labels_ref, weight_ref, w_ref, b_ref, out_ref):
    """One grid step == Wb sliding windows flattened to R = Wb*L rows.

    Computes sum over rows of (lse - picked_logit) * row_weight, where
    row_weight already folds in label validity and target_len / valid_count,
    and writes the per-step partial broadcast over a lane-dense (1, 1, 128)
    output slab (unmasked vst; grid axis stays 'parallel').
    """
    h = hidden_ref[...]                     # [R, H]  bf16
    lbl = labels_ref[...]                   # [R, 1]  int32 (shifted labels, -100 = ignore)
    wgt = weight_ref[...]                   # [R, 1]  f32 per-row weight

    # bf16 x bf16 matmul, f32 accumulation; bias add in f32.
    logits = jnp.dot(h, w_ref[...], preferred_element_type=jnp.float32) + b_ref[...]  # [R, V] f32

    # numerically-stable log-sum-exp (f32 elementwise path)
    m = jnp.max(logits, axis=-1, keepdims=True)                                   # [R, 1]
    lse = jnp.log(jnp.sum(jnp.exp(logits - m), axis=-1, keepdims=True)) + m       # [R, 1]

    # In-kernel label selection: lane iota compare (no HBM one-hot, no gather).
    # Ignored rows (label = -100) never match a lane index >= 0 -> picked = 0,
    # and their row weight is 0, so they contribute nothing.
    iota_v = jax.lax.broadcasted_iota(jnp.int32, logits.shape, 1)                 # [R, V]
    onehot = (iota_v == lbl).astype(jnp.float32)                                  # [R, V]
    picked = jnp.sum(onehot * logits, axis=-1, keepdims=True)                     # [R, 1]

    step_loss = jnp.sum((lse - picked) * wgt)                                     # scalar

    out_ref[...] = jnp.broadcast_to(step_loss, out_ref.shape).astype(jnp.float32)


@partial(jax.jit, static_argnames=("wb",))
def _windows_lls(ids_win, labels_win, row_weight, embed, w_head, b_head, *, wb):
    """Sum over windows of (mean shifted-CE over valid labels) * target_len.

    ids_win / labels_win / row_weight are host-padded to a multiple of `wb`
    windows; padded windows have weight 0 and contribute nothing.
    """
    NWp, L = ids_win.shape
    H = embed.shape[1]
    V = w_head.shape[1]
    steps = NWp // wb
    R = wb * L                               # MXU rows per grid step

    # One embedding gather for all window positions; bf16 activations for the
    # MXU (halves activation DMA).  Head weight cast once here (resident tile).
    # TODO(synk): at realistic sizes, index the un-windowed [S, H] hidden via
    # scalar-prefetched window offsets instead of duplicating overlapping rows.
    hidden = jnp.take(embed, ids_win.reshape(-1), axis=0).astype(jnp.bfloat16)    # [NWp*L, H]
    labels = labels_win.reshape(-1, 1)                                            # [NWp*L, 1]
    weights = row_weight.reshape(-1, 1)                                           # [NWp*L, 1]
    w_bf16 = w_head.astype(jnp.bfloat16)

    out = pl.pallas_call(
        _ce_window_kernel,
        grid_spec=pltpu.PrefetchScalarGridSpec(
            num_scalar_prefetch=0,
            grid=(steps,),
            in_specs=[
                pl.BlockSpec((R, H), lambda s: (s, 0)),     # hidden rows (bf16)
                pl.BlockSpec((R, 1), lambda s: (s, 0)),     # shifted labels (int32)
                pl.BlockSpec((R, 1), lambda s: (s, 0)),     # per-row weights (f32)
                pl.BlockSpec((H, V), lambda s: (0, 0)),     # head weight (resident)
                pl.BlockSpec((1, V), lambda s: (0, 0)),     # head bias (resident)
            ],
            out_specs=pl.BlockSpec((1, 1, V), lambda s: (s, 0, 0)),
        ),
        out_shape=jax.ShapeDtypeStruct((steps, 1, V), jnp.float32),
        compiler_params=pltpu.CompilerParams(
            dimension_semantics=("parallel",),   # step axis shards across TCs (v7x)
        ),
    )(hidden, labels, weights, w_bf16, b_head)

    # per-step partials -> single lls scalar (inside the same jit)
    return jnp.sum(out[:, 0, 0])


def _choose_window_batch(n_windows, window_len):
    """Windows per grid step: target ~256 MXU rows (v6e/v7x systolic height),
    but keep >= 2 grid steps when possible so v7x's two TensorCores both work."""
    wb_rows = max(1, 256 // window_len)
    wb_split = max(1, pl.next_power_of_2(max(1, (n_windows + 1) // 2)))
    return max(1, min(wb_rows, wb_split))


# ------------------------- synthetic causal LM ---------------------------
class TinyCausalLM:
    """Embedding lookup + linear head + shifted CE; batched over windows."""

    def __init__(self, key):
        k_e, k_w, k_b = jax.random.split(key, 3)
        self.embed = jax.random.normal(k_e, (VOCAB, HIDDEN), jnp.float32) * 0.1
        self.w_head = jax.random.normal(k_w, (HIDDEN, VOCAB), jnp.float32) * 0.1
        self.b_head = jax.random.normal(k_b, (1, VOCAB), jnp.float32) * 0.01

    def windows_loss(self, ids_win, labels_win, row_weight, wb):
        """All windows evaluated in a single pallas_call; returns sum_w mean_CE_w * target_len_w."""
        return _windows_lls(
            jnp.asarray(ids_win, jnp.int32),
            jnp.asarray(labels_win, jnp.int32),
            jnp.asarray(row_weight, jnp.float32),
            self.embed, self.w_head, self.b_head,
            wb=int(wb),
        )


# ----------------- PerplexityBase port (host-side control) ----------------
def _get_words(word_ids, start_idx, end_idx):
    if word_ids.ndim > 1:
        return np.array(word_ids[:, start_idx:end_idx], copy=True)
    return np.array(word_ids[start_idx:end_idx], copy=True)


def _set_words(word_ids, start_idx, end_idx, val):
    if word_ids.ndim > 1:
        word_ids[:, start_idx:end_idx] = val
    else:
        word_ids[start_idx:end_idx] = val
    return np.array(word_ids, copy=True)


class PerplexityBase:
    def __init__(self, stride=STRIDE, max_context_len=MAX_CONTEXT_LEN):
        self.stride = stride
        self.max_context_len = max_context_len
        self.reset()

    def reset(self):
        self.lls = jnp.asarray(0.0, jnp.float32)
        self.count = jnp.asarray(0.0, jnp.float32)

    def calculate_ppl_for_sequence(self, input_ids, labels, n_words_in_input, model):
        # Same window bookkeeping as the reference loop, but the model is
        # evaluated ONCE for all windows (single pallas_call, Wb windows per
        # grid step) instead of once per window.
        L = self.max_context_len
        starts, ends, tlens = [], [], []
        end_idx = 0
        for word_idx in range(0, n_words_in_input, self.stride):
            start_idx = max(word_idx + self.stride - self.max_context_len, 0)
            end_idx = min(word_idx + self.stride, n_words_in_input)
            starts.append(start_idx)
            ends.append(end_idx)
            tlens.append(end_idx - word_idx)

        n_windows = len(starts)
        if n_windows:
            wb = _choose_window_batch(n_windows, L)
            nw_pad = ((n_windows + wb - 1) // wb) * wb

            ids_np = np.asarray(input_ids, dtype=np.int32)
            lbl_np = np.asarray(labels, dtype=np.int32)

            ids_win = np.zeros((nw_pad, L), np.int32)              # pad id 0 (weight-masked)
            lbl_win = np.full((nw_pad, L), IGNORE_INDEX, np.int32)
            wgt_win = np.zeros((nw_pad, L), np.float32)

            for w, (s, e, t) in enumerate(zip(starts, ends, tlens)):
                wl = e - s
                ids_win[w, :wl] = _get_words(ids_np, s, e)
                out_t = _get_words(lbl_np, s, e)
                out_t = _set_words(out_t, 0, -t, IGNORE_INDEX)     # mask context prefix
                # HF causal shift: position j is scored against label j+1.
                lbl_win[w, : wl - 1] = out_t[1:]
                valid = (lbl_win[w] != IGNORE_INDEX)
                cnt = float(max(int(valid.sum()), 1))
                # per-row weight folds in validity and target_len / valid_count
                wgt_win[w] = valid.astype(np.float32) * (float(t) / cnt)

            lls = model.windows_loss(ids_win, lbl_win, wgt_win, wb)
            self.lls = self.lls + lls
        self.count = self.count + jnp.asarray(float(end_idx), jnp.float32)

    def update(self, input_ids, model):
        labels = np.array(input_ids, copy=True)
        n_words_in_input = labels.shape[0]
        self.calculate_ppl_for_sequence(np.asarray(input_ids), labels,
                                        n_words_in_input, model)

    def compute(self):
        return jnp.exp(self.lls / self.count)

    def forward(self, *args, **kwargs):
        self.update(*args, **kwargs)


# --------------------------- pure reference ------------------------------
def _reference_ppl(input_ids, model, stride, max_context_len):
    """Numpy re-implementation of the original per-window flow (correctness check)."""
    ids = np.asarray(input_ids, dtype=np.int64)
    n = ids.shape[0]
    embed = np.asarray(model.embed)
    w = np.asarray(model.w_head)
    b = np.asarray(model.b_head)
    lls, end_idx = 0.0, 0
    for word_idx in range(0, n, stride):
        start_idx = max(word_idx + stride - max_context_len, 0)
        end_idx = min(word_idx + stride, n)
        target_len = end_idx - word_idx
        inp = ids[start_idx:end_idx]
        out = inp.copy()
        out[0:-target_len] = IGNORE_INDEX
        shifted = np.concatenate([out[1:], [IGNORE_INDEX]])
        logits = embed[inp] @ w + b
        m = logits.max(-1, keepdims=True)
        lse = np.log(np.exp(logits - m).sum(-1, keepdims=True))[:, 0] + m[:, 0]
        valid = shifted != IGNORE_INDEX
        picked = logits[np.arange(len(inp)), np.clip(shifted, 0, None)]
        loss_sum = float(((lse - picked) * valid).sum())
        cnt = max(float(valid.sum()), 1.0)
        lls += (loss_sum / cnt) * float(target_len)
    return np.exp(lls / float(end_idx))


# --------------------------------- main ----------------------------------
if __name__ == "__main__":
    key = jax.random.PRNGKey(0)
    k_model, k_ids = jax.random.split(key)

    model = TinyCausalLM(k_model)
    input_ids = np.asarray(
        jax.random.randint(k_ids, (SEQ_LEN,), 0, VOCAB, dtype=jnp.int32)
    )

    metric = PerplexityBase(stride=STRIDE, max_context_len=MAX_CONTEXT_LEN)
    metric.forward(input_ids, model)
    ppl = metric.compute()
    jax.block_until_ready(ppl)

    ppl_ref = _reference_ppl(input_ids, model, STRIDE, MAX_CONTEXT_LEN)
    # bf16 MXU operands (f32 accumulate) -> slightly looser tolerance than pure f32.
    np.testing.assert_allclose(np.asarray(ppl), ppl_ref, rtol=1e-2, atol=1e-3)

    print("KERNEL_OK")
</pallas_src>

<mosaic_0001>
module attributes {stable_mosaic.version = 11 : i64} {
  func.func @_ce_window_kernel(%arg0: i32, %arg1: memref<128x32xbf16, #tpu.memory_space<vmem>>, %arg2: memref<128x1xi32, #tpu.memory_space<vmem>>, %arg3: memref<128x1xf32, #tpu.memory_space<vmem>>, %arg4: memref<32x128xbf16, #tpu.memory_space<vmem>>, %arg5: memref<1x128xf32, #tpu.memory_space<vmem>>, %arg6: memref<1x1x128xf32, #tpu.memory_space<vmem>>) attributes {dimension_semantics = [#tpu.dimension_semantics<parallel>], iteration_bounds = array<i64: 2>, scalar_prefetch = 0 : i64, scratch_operands = 0 : i64, tpu.core_type = #tpu.core_type<tc>, window_params = [{transform_indices = @transform_0, window_bounds = array<i64: 128, 32>}, {transform_indices = @transform_1, window_bounds = array<i64: 128, 1>}, {transform_indices = @transform_2, window_bounds = array<i64: 128, 1>}, {pipeline_mode = #tpu.pipeline_mode<synchronous>, transform_indices = @transform_3, window_bounds = array<i64: 32, 128>}, {pipeline_mode = #tpu.pipeline_mode<synchronous>, transform_indices = @transform_4, window_bounds = array<i64: 1, 128>}, {transform_indices = @transform_5, window_bounds = array<i64: 1, 1, 128>}]} {
    %c0 = arith.constant 0 : index
    %c0_0 = arith.constant 0 : index
    %0 = vector.load %arg1[%c0, %c0_0] : memref<128x32xbf16, #tpu.memory_space<vmem>>, vector<128x32xbf16>
    %c0_1 = arith.constant 0 : index
    %c0_2 = arith.constant 0 : index
    %1 = vector.load %arg2[%c0_1, %c0_2] : memref<128x1xi32, #tpu.memory_space<vmem>>, vector<128x1xi32>
    %c0_3 = arith.constant 0 : index
    %c0_4 = arith.constant 0 : index
    %2 = vector.load %arg3[%c0_3, %c0_4] : memref<128x1xf32, #tpu.memory_space<vmem>>, vector<128x1xf32>
    %c0_5 = arith.constant 0 : index
    %c0_6 = arith.constant 0 : index
    %3 = vector.load %arg4[%c0_5, %c0_6] : memref<32x128xbf16, #tpu.memory_space<vmem>>, vector<32x128xbf16>
    %cst = arith.constant dense<0.000000e+00> : vector<128x128xf32>
    %4 = tpu.matmul %0, %3, %cst {dimension_numbers = #tpu.dot_dimension_numbers<[1], [0], [0], [1], [0, 0, 1, 1], [], []>} : vector<128x32xbf16>, vector<32x128xbf16>, vector<128x128xf32> -> vector<128x128xf32>
    %c0_7 = arith.constant 0 : index
    %c0_8 = arith.constant 0 : index
    %5 = vector.load %arg5[%c0_7, %c0_8] : memref<1x128xf32, #tpu.memory_space<vmem>>, vector<1x128xf32>
    %6 = vector.broadcast %5 : vector<1x128xf32> to vector<128x128xf32>
    %7 = arith.addf %4, %6 : vector<128x128xf32>
    %cst_9 = arith.constant dense<0xFF800000> : vector<128xf32>
    %8 = vector.multi_reduction <maximumf>, %7, %cst_9 [1] : vector<128x128xf32> to vector<128xf32>
    %9 = vector.shape_cast %8 : vector<128xf32> to vector<128x1xf32>
    %10 = vector.broadcast %9 : vector<128x1xf32> to vector<128x128xf32>
    %11 = arith.subf %7, %10 : vector<128x128xf32>
    %12 = math.exp %11 : vector<128x128xf32>
    %cst_10 = arith.constant dense<0.000000e+00> : vector<128xf32>
    %13 = vector.multi_reduction <add>, %12, %cst_10 [1] : vector<128x128xf32> to vector<128xf32>
    %14 = vector.shape_cast %13 : vector<128xf32> to vector<128x1xf32>
    %15 = math.log %14 : vector<128x1xf32>
    %16 = arith.addf %15, %9 : vector<128x1xf32>
    %17 = tpu.iota {dimensions = array<i32: 1>} : vector<128x128xi32>
    %18 = vector.broadcast %1 : vector<128x1xi32> to vector<128x128xi32>
    %19 = arith.cmpi eq, %17, %18 : vector<128x128xi32>
    %20 = arith.extui %19 : vector<128x128xi1> to vector<128x128xi32>
    %21 = arith.sitofp %20 : vector<128x128xi32> to vector<128x128xf32>
    %22 = arith.mulf %21, %7 : vector<128x128xf32>
    %cst_11 = arith.constant dense<0.000000e+00> : vector<128xf32>
    %23 = vector.multi_reduction <add>, %22, %cst_11 [1] : vector<128x128xf32> to vector<128xf32>
    %24 = vector.shape_cast %23 : vector<128xf32> to vector<128x1xf32>
    %25 = arith.subf %16, %24 : vector<128x1xf32>
    %26 = arith.mulf %25, %2 : vector<128x1xf32>
    %27 = vector.shape_cast %26 : vector<128x1xf32> to vector<1x128x1xf32>
    %cst_12 = arith.constant dense<0.000000e+00> : vector<1xf32>
    %28 = vector.multi_reduction <add>, %27, %cst_12 [1, 2] : vector<1x128x1xf32> to vector<1xf32>
    %29 = vector.shape_cast %28 : vector<1xf32> to vector<1x1x1xf32>
    %30 = vector.extract %29[0, 0, 0] : f32 from vector<1x1x1xf32>
    %31 = vector.broadcast %30 : f32 to vector<1x1x128xf32>
    %c0_13 = arith.constant 0 : index
    %c0_14 = arith.constant 0 : index
    %c0_15 = arith.constant 0 : index
    %32 = vector.load %arg6[%c0_13, %c0_14, %c0_15] : memref<1x1x128xf32, #tpu.memory_space<vmem>>, vector<1x1x128xf32>
    tpu.vector_store %arg6[%c0_13, %c0_14, %c0_15], %31 {strides = array<i32>} : memref<1x1x128xf32, #tpu.memory_space<vmem>>, vector<1x1x128xf32>,
    return
  }
  func.func @transform_0(%arg0: i32) -> (i32, i32) {
    %c0_i32 = arith.constant 0 : i32
    %c0_i32_0 = arith.constant 0 : i32
    return %arg0, %c0_i32 : i32, i32
  }
  func.func @transform_1(%arg0: i32) -> (i32, i32) {
    %c0_i32 = arith.constant 0 : i32
    %c0_i32_0 = arith.constant 0 : i32
    return %arg0, %c0_i32 : i32, i32
  }
  func.func @transform_2(%arg0: i32) -> (i32, i32) {
    %c0_i32 = arith.constant 0 : i32
    %c0_i32_0 = arith.constant 0 : i32
    return %arg0, %c0_i32 : i32, i32
  }
  func.func @transform_3(%arg0: i32) -> (i32, i32) {
    %c0_i32 = arith.constant 0 : i32
    %c0_i32_0 = arith.constant 0 : i32
    %c0_i32_1 = arith.constant 0 : i32
    return %c0_i32, %c0_i32_0 : i32, i32
  }
  func.func @transform_4(%arg0: i32) -> (i32, i32) {
    %c0_i32 = arith.constant 0 : i32
    %c0_i32_0 = arith.constant 0 : i32
    %c0_i32_1 = arith.constant 0 : i32
    return %c0_i32, %c0_i32_0 : i32, i32
  }
  func.func @transform_5(%arg0: i32) -> (i32, i32, i32) {
    %c0_i32 = arith.constant 0 : i32
    %c0_i32_0 = arith.constant 0 : i32
    %c0_i32_1 = arith.constant 0 : i32
    return %arg0, %c0_i32, %c0_i32_0 : i32, i32, i32
  }
}

</mosaic_0001>

<llo_original>
// kernel: _windows_lls.1
$region0: #{_windows_lls.1}
  #allocation0 [shape = 'u32[]', space=smem, size = 0x4, offset = 0x4, fixed_abs, tag = 'smem constant byte address 0x4 - core index']
  #allocation1 [shape = 'u32[144,128]{1,0:T(1,128)}', space=vmem, size = 0x12000, scoped, tag = 'internal scratch']
  %s0 = inlined_call_operand.vmem [shape: bf16[256,32], index: 0, kind: input, shape index: {}]
  %s1 = inlined_call_operand.vmem [shape: s32[256,1], index: 1, kind: input, shape index: {}]
  %s2 = inlined_call_operand.vmem [shape: f32[256,1], index: 2, kind: input, shape index: {}]
  %s3 = inlined_call_operand.vmem [shape: bf16[32,128], index: 3, kind: input, shape index: {}]
  %s4 = inlined_call_operand.vmem [shape: f32[1,128], index: 4, kind: input, shape index: {}]
  %s5 = inlined_call_operand.vmem [shape: f32[2,1,128], index: 5, kind: output, shape index: {}]
  %s6 = sld [smem:[#allocation0]]
  $region53: #{_windows_lls.1} parent=0
    _
  %s8 = ssub.s32 1, %s6
  %s9 = scalar_select 0, %s8, %s6
  loop: start=0, step=1, limit=4
  $region2: #{_windows_lls.1} parent=0 // loop_pre_header
    _
  $region3: #{_windows_lls.1} parent=0 // loop_header
    %s11 = sphi 0, %s15
    %p12 = scmp.ge.s32.totalorder %s11, 4
    %s21 = sphi 0, %s23
    %s24 = sphi 0, %s21
    %s25 = sphi 0, %s24
    %s41 = sphi 0, %s25
    %s47 = sphi 0, %s49
    %s50 = sphi 0, %s47
    %s51 = sphi 0, %s50
    %s67 = sphi 0, %s51
    %s73 = sphi 0, %s75
    %s76 = sphi 0, %s73
    %s77 = sphi 0, %s76
    %s93 = sphi 0, %s77
    %s97 = sphi 0, %s97
    %s99 = sphi 0, %s97
    %s100 = sphi 0, %s99
    %s114 = sphi 0, %s100
    %s118 = sphi 0, %s118
    %s120 = sphi 0, %s118
    %s121 = sphi 0, %s120
    %s135 = sphi 0, %s121
    %s141 = sphi 0, %s143
    %s144 = sphi 0, %s141
    %s145 = sphi 0, %s144
    %s161 = sphi 0, %s145
  $region4: #{_windows_lls.1} parent=0 // loop_header_branch
    %14 = sbr.rel (%p12) target = $region8
  $region5: #{_windows_lls.1} parent=0 // loop_body
    %s16 = ssub.s32 %s11, 1
    %s17 = ssub.s32 %s11, 2
    %s18 = sadd.s32 %s11, 1
    %s19 = ssub.s32 %s11, %s18
    %p20 = scmp.eq.s32.totalorder %s19, 0
    %s22 = sadd.s32 %s21, 1
    %s23 = scalar_select %p20, %s21, %s22
    %p26 = pneg %p20
    %p27 = scmp.eq.s32.totalorder %s11, 1
    %p28 = por %p26, %p27
    %p29 = scmp.ne.s32.totalorder %s21, %s24
    %p30 = scmp.eq.s32.totalorder %s11, 0
    %p31 = por %p29, %p30
    %p32 = scmp.ne.s32.totalorder %s21, %s24
    %p33 = scmp.eq.s32.totalorder %s16, 1
    %p34 = por %p32, %p33
    %p35 = scmp.ne.s32.totalorder %s24, %s25
    %p36 = scmp.eq.s32.totalorder %s16, 0
    %p37 = por %p35, %p36
    %p38 = scmp.ne.s32.totalorder %s24, %s25
    %p39 = scmp.eq.s32.totalorder %s17, 1
    %p40 = por %p38, %p39
    %p42 = scmp.ne.s32.totalorder %s25, %s41
    %p43 = scmp.eq.s32.totalorder %s17, 0
    %p44 = por %p42, %p43
    %s45 = ssub.s32 %s11, %s18
    %p46 = scmp.eq.s32.totalorder %s45, 0
    %s48 = sadd.s32 %s47, 1
    %s49 = scalar_select %p46, %s47, %s48
    %p52 = pneg %p46
    %p53 = scmp.eq.s32.totalorder %s11, 1
    %p54 = por %p52, %p53
    %p55 = scmp.ne.s32.totalorder %s47, %s50
    %p56 = scmp.eq.s32.totalorder %s11, 0
    %p57 = por %p55, %p56
    %p58 = scmp.ne.s32.totalorder %s47, %s50
    %p59 = scmp.eq.s32.totalorder %s16, 1
    %p60 = por %p58, %p59
    %p61 = scmp.ne.s32.totalorder %s50, %s51
    %p62 = scmp.eq.s32.totalorder %s16, 0
    %p63 = por %p61, %p62
    %p64 = scmp.ne.s32.totalorder %s50, %s51
    %p65 = scmp.eq.s32.totalorder %s17, 1
    %p66 = por %p64, %p65
    %p68 = scmp.ne.s32.totalorder %s51, %s67
    %p69 = scmp.eq.s32.totalorder %s17, 0
    %p70 = por %p68, %p69
    %s71 = ssub.s32 %s11, %s18
    %p72 = scmp.eq.s32.totalorder %s71, 0
    %s74 = sadd.s32 %s73, 1
    %s75 = scalar_select %p72, %s73, %s74
    %p78 = pneg %p72
    %p79 = scmp.eq.s32.totalorder %s11, 1
    %p80 = por %p78, %p79
    %p81 = scmp.ne.s32.totalorder %s73, %s76
    %p82 = scmp.eq.s32.totalorder %s11, 0
    %p83 = por %p81, %p82
    %p84 = scmp.ne.s32.totalorder %s73, %s76
    %p85 = scmp.eq.s32.totalorder %s16, 1
    %p86 = por %p84, %p85
    %p87 = scmp.ne.s32.totalorder %s76, %s77
    %p88 = scmp.eq.s32.totalorder %s16, 0
    %p89 = por %p87, %p88
    %p90 = scmp.ne.s32.totalorder %s76, %s77
    %p91 = scmp.eq.s32.totalorder %s17, 1
    %p92 = por %p90, %p91
    %p94 = scmp.ne.s32.totalorder %s77, %s93
    %p95 = scmp.eq.s32.totalorder %s17, 0
    %p96 = por %p94, %p95
    %s98 = sadd.s32 %s97, 1
    %p101 = scmp.eq.s32.totalorder %s11, 1
    %p102 = scmp.ne.s32.totalorder %s97, %s99
    %p103 = scmp.eq.s32.totalorder %s11, 0
    %p104 = por %p102, %p103
    %p105 = scmp.ne.s32.totalorder %s97, %s99
    %p106 = scmp.eq.s32.totalorder %s16, 1
    %p107 = por %p105, %p106
    %p108 = scmp.ne.s32.totalorder %s99, %s100
    %p109 = scmp.eq.s32.totalorder %s16, 0
    %p110 = por %p108, %p109
    %p111 = scmp.ne.s32.totalorder %s99, %s100
    %p112 = scmp.eq.s32.totalorder %s17, 1
    %p113 = por %p111, %p112
    %p115 = scmp.ne.s32.totalorder %s100, %s114
    %p116 = scmp.eq.s32.totalorder %s17, 0
    %p117 = por %p115, %p116
    %s119 = sadd.s32 %s118, 1
    %p122 = scmp.eq.s32.totalorder %s11, 1
    %p123 = scmp.ne.s32.totalorder %s118, %s120
    %p124 = scmp.eq.s32.totalorder %s11, 0
    %p125 = por %p123, %p124
    %p126 = scmp.ne.s32.totalorder %s118, %s120
    %p127 = scmp.eq.s32.totalorder %s16, 1
    %p128 = por %p126, %p127
    %p129 = scmp.ne.s32.totalorder %s120, %s121
    %p130 = scmp.eq.s32.totalorder %s16, 0
    %p131 = por %p129, %p130
    %p132 = scmp.ne.s32.totalorder %s120, %s121
    %p133 = scmp.eq.s32.totalorder %s17, 1
    %p134 = por %p132, %p133
    %p136 = scmp.ne.s32.totalorder %s121, %s135
    %p137 = scmp.eq.s32.totalorder %s17, 0
    %p138 = por %p136, %p137
    %s139 = ssub.s32 %s11, %s18
    %p140 = scmp.eq.s32.totalorder %s139, 0
    %s142 = sadd.s32 %s141, 1
    %s143 = scalar_select %p140, %s141, %s142
    %p146 = pneg %p140
    %p147 = scmp.eq.s32.totalorder %s11, 1
    %p148 = por %p146, %p147
    %p149 = scmp.ne.s32.totalorder %s141, %s144
    %p150 = scmp.eq.s32.totalorder %s11, 0
    %p151 = por %p149, %p150
    %p152 = scmp.ne.s32.totalorder %s141, %s144
    %p153 = scmp.eq.s32.totalorder %s16, 1
    %p154 = por %p152, %p153
    %p155 = scmp.ne.s32.totalorder %s144, %s145
    %p156 = scmp.eq.s32.totalorder %s16, 0
    %p157 = por %p155, %p156
    %p158 = scmp.ne.s32.totalorder %s144, %s145
    %p159 = scmp.eq.s32.totalorder %s17, 1
    %p160 = por %p158, %p159
    %p162 = scmp.ne.s32.totalorder %s145, %s161
    %p163 = scmp.eq.s32.totalorder %s17, 0
    %p164 = por %p162, %p163
    %p165 = scmp.le.s32.totalorder 1, %s11
    %p166 = scmp.lt.s32.totalorder %s11, 3
    %p167 = pnand %p165, %p166
    %p168 = pneg %p167
    // Predicated region
    $region9: #{_windows_lls.1} parent=5 // pred_check
      _
    $region10: #{_windows_lls.1} parent=5 // pred_check_branch
      %170 = sbr.rel (%p167) target = $region12
    $region11: #{_windows_lls.1} parent=5 // pred_region
      %s171 = ssub.s32 %s11, 1
      // Predicated region
      $region13: #{_windows_lls.1} parent=11 // pred_check
        %p172 = pneg %p110
      $region14: #{_windows_lls.1} parent=11 // pred_check_branch
        %174 = sbr.rel (%p172) target = $region16
      $region15: #{_windows_lls.1} parent=11 // pred_region
        _
      $region16: #{_windows_lls.1} parent=11 // pred_fallthru
        _
      // Predicated region
      $region17: #{_windows_lls.1} parent=11 // pred_check
        %p175 = pneg %p131
      $region18: #{_windows_lls.1} parent=11 // pred_check_branch
        %177 = sbr.rel (%p175) target = $region20
      $region19: #{_windows_lls.1} parent=11 // pred_region
        _
      $region20: #{_windows_lls.1} parent=11 // pred_fallthru
        _
    $region12: #{_windows_lls.1} parent=5 // pred_fallthru
      _
    %p178 = scmp.lt.s32.totalorder %s11, 2
    // Predicated region
    $region21: #{_windows_lls.1} parent=5 // pred_check
      %p179 = pneg %p178
    $region22: #{_windows_lls.1} parent=5 // pred_check_branch
      %181 = sbr.rel (%p179) target = $region24
    $region23: #{_windows_lls.1} parent=5 // pred_region
      // Predicated region
      $region25: #{_windows_lls.1} parent=23 // pred_check
        %p182 = pneg %p31
      $region26: #{_windows_lls.1} parent=23 // pred_check_branch
        %184 = sbr.rel (%p182) target = $region28
      $region27: #{_windows_lls.1} parent=23 // pred_region
        %s185 = smul.u32 16, %s11
        %p186 = scmp.lt.s32.totalorder %s185, 31
        %s187 = scalar_select %p186, %s185, 31
        %s188 = smul.addr %s187, 4
        %s189 = scalar_lea.vmem %s0, %s188
        %s190 = smul.u32 16, %s11
      $region28: #{_windows_lls.1} parent=23 // pred_fallthru
        _
      // Predicated region
      $region29: #{_windows_lls.1} parent=23 // pred_check
        %p191 = pneg %p57
      $region30: #{_windows_lls.1} parent=23 // pred_check_branch
        %193 = sbr.rel (%p191) target = $region32
      $region31: #{_windows_lls.1} parent=23 // pred_region
        %s194 = smul.u32 16, %s11
        %p195 = scmp.lt.s32.totalorder %s194, 31
        %s196 = scalar_select %p195, %s194, 31
        %s197 = smul.addr %s196, 8
        %s198 = scalar_lea.vmem %s1, %s197
        %s199 = smul.u32 16, %s11
      $region32: #{_windows_lls.1} parent=23 // pred_fallthru
        _
      // Predicated region
      $region33: #{_windows_lls.1} parent=23 // pred_check
        %p200 = pneg %p83
      $region34: #{_windows_lls.1} parent=23 // pred_check_branch
        %202 = sbr.rel (%p200) target = $region36
      $region35: #{_windows_lls.1} parent=23 // pred_region
        %s203 = smul.u32 16, %s11
        %p204 = scmp.lt.s32.totalorder %s203, 31
        %s205 = scalar_select %p204, %s203, 31
        %s206 = smul.addr %s205, 8
        %s207 = scalar_lea.vmem %s2, %s206
        %s208 = smul.u32 16, %s11
      $region36: #{_windows_lls.1} parent=23 // pred_fallthru
        _
    $region24: #{_windows_lls.1} parent=5 // pred_fallthru
      _
    %p209 = scmp.le.s32.totalorder 1, %s11
    %p210 = scmp.lt.s32.totalorder %s11, 3
    %p211 = pnand %p209, %p210
    %p212 = pneg %p211
    // Predicated region
    $region37: #{_windows_lls.1} parent=5 // pred_check
      _
    $region38: #{_windows_lls.1} parent=5 // pred_check_branch
      %214 = sbr.rel (%p211) target = $region40
    $region39: #{_windows_lls.1} parent=5 // pred_region
      %s215 = ssub.s32 %s11, 1
      %s216 = smul.u32 16, %s16
      %p217 = scmp.lt.s32.totalorder %s216, 31
      %s218 = scalar_select %p217, %s216, 31
      %s219 = smul.addr %s218, 4
      %s220 = scalar_lea.vmem %s0, %s219
      %p221 = pneg %p37
      %p222 = pneg %p34
      %s223 = smul.u32 16, %s16
      %p224 = scmp.lt.s32.totalorder %s223, 31
      %s225 = scalar_select %p224, %s223, 31
      %s226 = smul.addr %s225, 8
      %s227 = scalar_lea.vmem %s1, %s226
      %p228 = pneg %p63
      %p229 = pneg %p60
      %s230 = smul.u32 16, %s16
      %p231 = scmp.lt.s32.totalorder %s230, 31
      %s232 = scalar_select %p231, %s230, 31
      %s233 = smul.addr %s232, 8
      %s234 = scalar_lea.vmem %s2, %s233
      %p235 = pneg %p89
      %p236 = pneg %p86
      %p237 = pneg %p110
      %p238 = pneg %p107
      %p239 = pneg %p131
      %p240 = pneg %p128
      %p241 = pneg %p157
      %p242 = pneg %p154
      %p243 = scmp.lt.s32.totalorder %s16, 1
      %s244 = scalar_select %p243, %s16, 1
      %s245 = scalar_lea.vmem %s5, %s244
      %s246 = smul.u32 16, %s16
      %p247 = scmp.lt.s32.totalorder %s246, 31
      %s248 = scalar_select %p247, %s246, 31
      %s249 = smul.addr %s248, 4
      %s250 = scalar_lea.vmem %s0, %s249
      %s251 = smul.u32 16, %s16
      %s252 = smul.u32 16, %s16
      %p253 = scmp.lt.s32.totalorder %s252, 31
      %s254 = scalar_select %p253, %s252, 31
      %s255 = smul.addr %s254, 8
      %s256 = scalar_lea.vmem %s1, %s255
      %s257 = smul.u32 16, %s16
      %s258 = smul.u32 16, %s16
      %p259 = scmp.lt.s32.totalorder %s258, 31
      %s260 = scalar_select %p259, %s258, 31
      %s261 = smul.addr %s260, 8
      %s262 = scalar_lea.vmem %s2, %s261
      %s263 = smul.u32 16, %s16
      %p264 = scmp.lt.s32.totalorder %s16, 1
      %s265 = scalar_select %p264, %s16, 1
      %s266 = scalar_lea.vmem %s5, %s265
      %v268 = vld [vmem:[%s250] sm:$0xf]
      %v269 = vld [vmem:[%s250 + $0x4] sm:$0xf]
      %v270 = vld [vmem:[%s250 + $0x8] sm:$0xf]
      %v271 = vld [vmem:[%s250 + $0xc] sm:$0xf]
      %v272 = vld [vmem:[%s250 + $0x10] sm:$0xf]
      %v273 = vld [vmem:[%s250 + $0x14] sm:$0xf]
      %v274 = vld [vmem:[%s250 + $0x18] sm:$0xf]
      %v275 = vld [vmem:[%s250 + $0x1c] sm:$0xf]
      %v276 = vld [vmem:[%s250 + $0x20] sm:$0xf]
      %v277 = vld [vmem:[%s250 + $0x24] sm:$0xf]
      %v278 = vld [vmem:[%s250 + $0x28] sm:$0xf]
      %v279 = vld [vmem:[%s250 + $0x2c] sm:$0xf]
      %v280 = vld [vmem:[%s250 + $0x30] sm:$0xf]
      %v281 = vld [vmem:[%s250 + $0x34] sm:$0xf]
      %v282 = vld [vmem:[%s250 + $0x38] sm:$0xf]
      %v283 = vld [vmem:[%s250 + $0x3c] sm:$0xf]
      %v284 = vld [vmem:[%s256] sm:$0xff]
      %v285 = vld [vmem:[%s256 + $0x8] sm:$0xff]
      %v286 = vld [vmem:[%s256 + $0x10] sm:$0xff]
      %v287 = vld [vmem:[%s256 + $0x18] sm:$0xff]
      %v288 = vld [vmem:[%s256 + $0x20] sm:$0xff]
      %v289 = vld [vmem:[%s256 + $0x28] sm:$0xff]
      %v290 = vld [vmem:[%s256 + $0x30] sm:$0xff]
      %v291 = vld [vmem:[%s256 + $0x38] sm:$0xff]
      %v292 = vld [vmem:[%s256 + $0x40] sm:$0xff]
      %v293 = vld [vmem:[%s256 + $0x48] sm:$0xff]
      %v294 = vld [vmem:[%s256 + $0x50] sm:$0xff]
      %v295 = vld [vmem:[%s256 + $0x58] sm:$0xff]
      %v296 = vld [vmem:[%s256 + $0x60] sm:$0xff]
      %v297 = vld [vmem:[%s256 + $0x68] sm:$0xff]
      %v298 = vld [vmem:[%s256 + $0x70] sm:$0xff]
      %v299 = vld [vmem:[%s256 + $0x78] sm:$0xff]
      %v300 = vld [vmem:[%s262] sm:$0xff]
      %v301 = vld [vmem:[%s262 + $0x8] sm:$0xff]
      %v302 = vld [vmem:[%s262 + $0x10] sm:$0xff]
      %v303 = vld [vmem:[%s262 + $0x18] sm:$0xff]
      %v304 = vld [vmem:[%s262 + $0x20] sm:$0xff]
      %v305 = vld [vmem:[%s262 + $0x28] sm:$0xff]
      %v306 = vld [vmem:[%s262 + $0x30] sm:$0xff]
      %v307 = vld [vmem:[%s262 + $0x38] sm:$0xff]
      %v308 = vld [vmem:[%s262 + $0x40] sm:$0xff]
      %v309 = vld [vmem:[%s262 + $0x48] sm:$0xff]
      %v310 = vld [vmem:[%s262 + $0x50] sm:$0xff]
      %v311 = vld [vmem:[%s262 + $0x58] sm:$0xff]
      %v312 = vld [vmem:[%s262 + $0x60] sm:$0xff]
      %v313 = vld [vmem:[%s262 + $0x68] sm:$0xff]
      %v314 = vld [vmem:[%s262 + $0x70] sm:$0xff]
      %v315 = vld [vmem:[%s262 + $0x78] sm:$0xff]
      %v316 = vld [vmem:[%s3] sm:$0xf]
      %v317 = vld [vmem:[%s3 + $0x4] sm:$0xf]
      %v318 = vld [vmem:[%s3 + $0x8] sm:$0xf]
      %v319 = vld [vmem:[%s3 + $0xc] sm:$0xf]
      %v320 = vld [vmem:[%s4] sm:$0x1]
      %v322 = vlaneseq
      %v323 = vshrl.u32 %v322, 7
      %v324 = vsub.s32 0, %v323
      %v325 = vrot.slane %v320, %v324
      %v343 = vunpack.c.l.b16 %v268
      %v344 = vunpack.c.l.b16 %v269
      %v345 = vunpack.c.l.b16 %v270
      %v346 = vunpack.c.l.b16 %v271
      %v347 = vunpack.c.l.b16 %v272
      %v348 = vunpack.c.l.b16 %v273
      %v349 = vunpack.c.l.b16 %v274
      %v350 = vunpack.c.l.b16 %v275
      %v351 = vunpack.c.l.b16 %v276
      %v352 = vunpack.c.l.b16 %v277
      %v353 = vunpack.c.l.b16 %v278
      %v354 = vunpack.c.l.b16 %v279
      %v355 = vunpack.c.l.b16 %v280
      %v356 = vunpack.c.l.b16 %v281
      %v357 = vunpack.c.l.b16 %v282
      %v358 = vunpack.c.l.b16 %v283
      %v359 = vpack.c.b16 %v344, %v343
      %v360 = vpack.c.b16 %v346, %v345
      %v361 = vpack.c.b16 %v348, %v347
      %v362 = vpack.c.b16 %v350, %v349
      %v363 = vpack.c.b16 %v352, %v351
      %v364 = vpack.c.b16 %v354, %v353
      %v365 = vpack.c.b16 %v356, %v355
      %v366 = vpack.c.b16 %v358, %v357
      %v371 = vunpack.c.l.b16 %v316
      %v372 = vunpack.c.l.b16 %v317
      %v373 = vunpack.c.l.b16 %v318
      %v374 = vunpack.c.l.b16 %v319
      %v375 = vpack.c.b16 %v372, %v371
      %v376 = vpack.c.b16 %v374, %v373
      %vm379 = vcmask 261120
      %v381 = vsel %vm379, %v359, 0
      %v384 = vsel %vm379, %v360, 0
      %v387 = vsel %vm379, %v361, 0
      %v390 = vsel %vm379, %v362, 0
      %v393 = vsel %vm379, %v363, 0
      %v396 = vsel %vm379, %v364, 0
      %v399 = vsel %vm379, %v365, 0
      %v402 = vsel %vm379, %v366, 0
      %404 = vmatprep.subr.bf16.mxu0 0
      %405 = vmatpush1.bf16.msra.mxu0 0
      %406 = vmatprep.subr.bf16.mxu0 0
      %407 = vmatpush1.bf16.msra.mxu0 0
      %408 = vmatprep.subr.bf16.mxu0 0
      %409 = vmatpush1.bf16.msra.mxu0 0
      %410 = vmatprep.subr.bf16.mxu0 0
      %411 = vmatpush1.bf16.msra.mxu0 0
      %412 = vmatprep.subr.bf16.mxu0 0
      %413 = vmatpush1.bf16.msra.mxu0 0
      %414 = vmatprep.subr.bf16.mxu0 0
      %415 = vmatpush1.bf16.msra.mxu0 0
      %416 = vmatprep.subr.bf16.mxu0 0
      %417 = vmatpush1.bf16.msra.mxu0 %v376
      %418 = vmatprep.subr.bf16.mxu0 0
      %419 = vmatpush1.bf16.msra.mxu0 %v375
      %420 = vmatprep.subr.bf16.mxu0 0
      %421 = vmatpush2.bf16.msra.mxu0 0
      %422 = vmatprep.subr.bf16.mxu0 0
      %423 = vmatpush2.bf16.msra.mxu0 0
      %424 = vmatprep.subr.bf16.mxu0 0
      %425 = vmatpush2.bf16.msra.mxu0 0
      %426 = vmatprep.subr.bf16.mxu0 0
      %427 = vmatpush2.bf16.msra.mxu0 0
      %428 = vmatprep.subr.bf16.mxu0 0
      %429 = vmatpush2.bf16.msra.mxu0 0
      %430 = vmatprep.subr.bf16.mxu0 0
      %431 = vmatpush2.bf16.msra.mxu0 0
      %432 = vmatprep.subr.bf16.mxu0 0
      %433 = vmatpush2.bf16.msra.mxu0 0
      %434 = vmatprep.subr.bf16.mxu0 0
      %435 = vmatpush2.bf16.msra.mxu0 0
      %436 = vmatprep.mubr.bf16.mxu0 0
      %437 = vmatmul.mubr.bf16.gmra.mxu0 %v381
      %v438 = vpop.f32.mrf.mxu0
      %v439 = vadd.f32 %v325, %v438
      %v440 = vpop.f32.mrf.mxu0
      %v441 = vpop.f32.mrf.mxu0
      %v442 = vadd.f32 %v325, %v441
      %v443 = vpop.f32.mrf.mxu0
      %444 = vmatprep.mubr.bf16.mxu0 0
      %445 = vmatmul.mubr.bf16.gmra.mxu0 %v384
      %v446 = vpop.f32.mrf.mxu0
      %v447 = vadd.f32 %v325, %v446
      %v448 = vpop.f32.mrf.mxu0
      %v449 = vpop.f32.mrf.mxu0
      %v450 = vadd.f32 %v325, %v449
      %v451 = vpop.f32.mrf.mxu0
      %452 = vmatprep.mubr.bf16.mxu0 0
      %453 = vmatmul.mubr.bf16.gmra.mxu0 %v387
      %v454 = vpop.f32.mrf.mxu0
      %v455 = vadd.f32 %v325, %v454
      %v456 = vpop.f32.mrf.mxu0
      %v457 = vpop.f32.mrf.mxu0
      %v458 = vadd.f32 %v325, %v457
      %v459 = vpop.f32.mrf.mxu0
      %460 = vmatprep.mubr.bf16.mxu0 0
      %461 = vmatmul.mubr.bf16.gmra.mxu0 %v390
      %v462 = vpop.f32.mrf.mxu0
      %v463 = vadd.f32 %v325, %v462
      %v464 = vpop.f32.mrf.mxu0
      %v465 = vpop.f32.mrf.mxu0
      %v466 = vadd.f32 %v325, %v465
      %v467 = vpop.f32.mrf.mxu0
      %468 = vmatprep.mubr.bf16.mxu0 0
      %469 = vmatmul.mubr.bf16.gmra.mxu0 %v393
      %v470 = vpop.f32.mrf.mxu0
      %v471 = vadd.f32 %v325, %v470
      %v472 = vpop.f32.mrf.mxu0
      %v473 = vpop.f32.mrf.mxu0
      %v474 = vadd.f32 %v325, %v473
      %v475 = vpop.f32.mrf.mxu0
      %476 = vmatprep.mubr.bf16.mxu0 0
      %477 = vmatmul.mubr.bf16.gmra.mxu0 %v396
      %v478 = vpop.f32.mrf.mxu0
      %v479 = vadd.f32 %v325, %v478
      %v480 = vpop.f32.mrf.mxu0
      %v481 = vpop.f32.mrf.mxu0
      %v482 = vadd.f32 %v325, %v481
      %v483 = vpop.f32.mrf.mxu0
      %484 = vmatprep.mubr.bf16.mxu0 0
      %485 = vmatmul.mubr.bf16.gmra.mxu0 %v399
      %v486 = vpop.f32.mrf.mxu0
      %v487 = vadd.f32 %v325, %v486
      %v488 = vpop.f32.mrf.mxu0
      %v489 = vpop.f32.mrf.mxu0
      %v490 = vadd.f32 %v325, %v489
      %v491 = vpop.f32.mrf.mxu0
      %492 = vmatprep.mubr.bf16.mxu0 0
      %493 = vmatmul.mubr.bf16.gmra.mxu0 %v402
      %v494 = vpop.f32.mrf.mxu0
      %v495 = vadd.f32 %v325, %v494
      %v496 = vpop.f32.mrf.mxu0
      %v497 = vpop.f32.mrf.mxu0
      %v498 = vadd.f32 %v325, %v497
      %v499 = vpop.f32.mrf.mxu0
      %500 = vdwg.mxu0
      %501 = vmax.xlane.f32.xlu0 %v439
      %v502 = vpop.xlane.xlu0 %501
      %503 = vmax.xlane.f32.xlu0 %v442
      %v504 = vpop.xlane.xlu0 %503
      %505 = vmax.xlane.f32.xlu0 %v447
      %v506 = vpop.xlane.xlu0 %505
      %507 = vmax.xlane.f32.xlu0 %v450
      %v508 = vpop.xlane.xlu0 %507
      %509 = vmax.xlane.f32.xlu0 %v455
      %v510 = vpop.xlane.xlu0 %509
      %511 = vmax.xlane.f32.xlu0 %v458
      %v512 = vpop.xlane.xlu0 %511
      %513 = vmax.xlane.f32.xlu0 %v463
      %v514 = vpop.xlane.xlu0 %513
      %515 = vmax.xlane.f32.xlu0 %v466
      %v516 = vpop.xlane.xlu0 %515
      %517 = vmax.xlane.f32.xlu0 %v471
      %v518 = vpop.xlane.xlu0 %517
      %519 = vmax.xlane.f32.xlu0 %v474
      %v520 = vpop.xlane.xlu0 %519
      %521 = vmax.xlane.f32.xlu0 %v479
      %v522 = vpop.xlane.xlu0 %521
      %523 = vmax.xlane.f32.xlu0 %v482
      %v524 = vpop.xlane.xlu0 %523
      %525 = vmax.xlane.f32.xlu0 %v487
      %v526 = vpop.xlane.xlu0 %525
      %527 = vmax.xlane.f32.xlu0 %v490
      %v528 = vpop.xlane.xlu0 %527
      %529 = vmax.xlane.f32.xlu0 %v495
      %v530 = vpop.xlane.xlu0 %529
      %531 = vmax.xlane.f32.xlu0 %v498
      %v532 = vpop.xlane.xlu0 %531
      %v533 = vsub.f32 %v439, %v502
      %v534 = vsub.f32 %v442, %v504
      %v535 = vsub.f32 %v447, %v506
      %v536 = vsub.f32 %v450, %v508
      %v537 = vsub.f32 %v455, %v510
      %v538 = vsub.f32 %v458, %v512
      %v539 = vsub.f32 %v463, %v514
      %v540 = vsub.f32 %v466, %v516
      %v541 = vsub.f32 %v471, %v518
      %v542 = vsub.f32 %v474, %v520
      %v543 = vsub.f32 %v479, %v522
      %v544 = vsub.f32 %v482, %v524
      %v545 = vsub.f32 %v487, %v526
      %v546 = vsub.f32 %v490, %v528
      %v547 = vsub.f32 %v495, %v530
      %v548 = vsub.f32 %v498, %v532
      %v549 = vmul.f32 %v533, 1.442695
      %v550 = vpow.pop %v549
      %v551 = vmul.f32 %v534, 1.442695
      %v552 = vpow.pop %v551
      %v553 = vmul.f32 %v535, 1.442695
      %v554 = vpow.pop %v553
      %v555 = vmul.f32 %v536, 1.442695
      %v556 = vpow.pop %v555
      %v557 = vmul.f32 %v537, 1.442695
      %v558 = vpow.pop %v557
      %v559 = vmul.f32 %v538, 1.442695
      %v560 = vpow.pop %v559
      %v561 = vmul.f32 %v539, 1.442695
      %v562 = vpow.pop %v561
      %v563 = vmul.f32 %v540, 1.442695
      %v564 = vpow.pop %v563
      %v565 = vmul.f32 %v541, 1.442695
      %v566 = vpow.pop %v565
      %v567 = vmul.f32 %v542, 1.442695
      %v568 = vpow.pop %v567
      %v569 = vmul.f32 %v543, 1.442695
      %v570 = vpow.pop %v569
      %v571 = vmul.f32 %v544, 1.442695
      %v572 = vpow.pop %v571
      %v573 = vmul.f32 %v545, 1.442695
      %v574 = vpow.pop %v573
      %v575 = vmul.f32 %v546, 1.442695
      %v576 = vpow.pop %v575
      %v577 = vmul.f32 %v547, 1.442695
      %v578 = vpow.pop %v577
      %v579 = vmul.f32 %v548, 1.442695
      %v580 = vpow.pop %v579
      %581 = vadd.xlane.f32.xlu0 %v550
      %v582 = vpop.xlane.xlu0 %581
      %583 = vadd.xlane.f32.xlu0 %v552
      %v584 = vpop.xlane.xlu0 %583
      %585 = vadd.xlane.f32.xlu0 %v554
      %v586 = vpop.xlane.xlu0 %585
      %587 = vadd.xlane.f32.xlu0 %v556
      %v588 = vpop.xlane.xlu0 %587
      %589 = vadd.xlane.f32.xlu0 %v558
      %v590 = vpop.xlane.xlu0 %589
      %591 = vadd.xlane.f32.xlu0 %v560
      %v592 = vpop.xlane.xlu0 %591
      %593 = vadd.xlane.f32.xlu0 %v562
      %v594 = vpop.xlane.xlu0 %593
      %595 = vadd.xlane.f32.xlu0 %v564
      %v596 = vpop.xlane.xlu0 %595
      %597 = vadd.xlane.f32.xlu0 %v566
      %v598 = vpop.xlane.xlu0 %597
      %599 = vadd.xlane.f32.xlu0 %v568
      %v600 = vpop.xlane.xlu0 %599
      %601 = vadd.xlane.f32.xlu0 %v570
      %v602 = vpop.xlane.xlu0 %601
      %603 = vadd.xlane.f32.xlu0 %v572
      %v604 = vpop.xlane.xlu0 %603
      %605 = vadd.xlane.f32.xlu0 %v574
      %v606 = vpop.xlane.xlu0 %605
      %607 = vadd.xlane.f32.xlu0 %v576
      %v608 = vpop.xlane.xlu0 %607
      %609 = vadd.xlane.f32.xlu0 %v578
      %v610 = vpop.xlane.xlu0 %609
      %611 = vadd.xlane.f32.xlu0 %v580
      %v612 = vpop.xlane.xlu0 %611
      %v613 = vlog2.pop %v582
      %v614 = vmul.f32 %v613, 0.6931472
      %v615 = vlog2.pop %v584
      %v616 = vmul.f32 %v615, 0.6931472
      %v617 = vlog2.pop %v586
      %v618 = vmul.f32 %v617, 0.6931472
      %v619 = vlog2.pop %v588
      %v620 = vmul.f32 %v619, 0.6931472
      %v621 = vlog2.pop %v590
      %v622 = vmul.f32 %v621, 0.6931472
      %v623 = vlog2.pop %v592
      %v624 = vmul.f32 %v623, 0.6931472
      %v625 = vlog2.pop %v594
      %v626 = vmul.f32 %v625, 0.6931472
      %v627 = vlog2.pop %v596
      %v628 = vmul.f32 %v627, 0.6931472
      %v629 = vlog2.pop %v598
      %v630 = vmul.f32 %v629, 0.6931472
      %v631 = vlog2.pop %v600
      %v632 = vmul.f32 %v631, 0.6931472
      %v633 = vlog2.pop %v602
      %v634 = vmul.f32 %v633, 0.6931472
      %v635 = vlog2.pop %v604
      %v636 = vmul.f32 %v635, 0.6931472
      %v637 = vlog2.pop %v606
      %v638 = vmul.f32 %v637, 0.6931472
      %v639 = vlog2.pop %v608
      %v640 = vmul.f32 %v639, 0.6931472
      %v641 = vlog2.pop %v610
      %v642 = vmul.f32 %v641, 0.6931472
      %v643 = vlog2.pop %v612
      %v644 = vmul.f32 %v643, 0.6931472
      %v645 = vadd.f32 %v614, %v502
      %v646 = vadd.f32 %v616, %v504
      %v647 = vadd.f32 %v618, %v506
      %v648 = vadd.f32 %v620, %v508
      %v649 = vadd.f32 %v622, %v510
      %v650 = vadd.f32 %v624, %v512
      %v651 = vadd.f32 %v626, %v514
      %v652 = vadd.f32 %v628, %v516
      %v653 = vadd.f32 %v630, %v518
      %v654 = vadd.f32 %v632, %v520
      %v655 = vadd.f32 %v634, %v522
      %v656 = vadd.f32 %v636, %v524
      %v657 = vadd.f32 %v638, %v526
      %v658 = vadd.f32 %v640, %v528
      %v659 = vadd.f32 %v642, %v530
      %v660 = vadd.f32 %v644, %v532
      %v661 = vlaneseq
      %v662 = vand.u32 %v661, 127
      %663 = vset.pattern.permute.xlu0 0
      %664 = vperm.xlu0 %663, %v284
      %v665 = vpop.permute.xlu0 %664
      %666 = vset.pattern.permute.xlu0 0
      %667 = vperm.xlu0 %666, %v285
      %v668 = vpop.permute.xlu0 %667
      %669 = vset.pattern.permute.xlu0 0
      %670 = vperm.xlu0 %669, %v286
      %v671 = vpop.permute.xlu0 %670
      %672 = vset.pattern.permute.xlu0 0
      %673 = vperm.xlu0 %672, %v287
      %v674 = vpop.permute.xlu0 %673
      %675 = vset.pattern.permute.xlu0 0
      %676 = vperm.xlu0 %675, %v288
      %v677 = vpop.permute.xlu0 %676
      %678 = vset.pattern.permute.xlu0 0
      %679 = vperm.xlu0 %678, %v289
      %v680 = vpop.permute.xlu0 %679
      %681 = vset.pattern.permute.xlu0 0
      %682 = vperm.xlu0 %681, %v290
      %v683 = vpop.permute.xlu0 %682
      %684 = vset.pattern.permute.xlu0 0
      %685 = vperm.xlu0 %684, %v291
      %v686 = vpop.permute.xlu0 %685
      %687 = vset.pattern.permute.xlu0 0
      %688 = vperm.xlu0 %687, %v292
      %v689 = vpop.permute.xlu0 %688
      %690 = vset.pattern.permute.xlu0 0
      %691 = vperm.xlu0 %690, %v293
      %v692 = vpop.permute.xlu0 %691
      %693 = vset.pattern.permute.xlu0 0
      %694 = vperm.xlu0 %693, %v294
      %v695 = vpop.permute.xlu0 %694
      %696 = vset.pattern.permute.xlu0 0
      %697 = vperm.xlu0 %696, %v295
      %v698 = vpop.permute.xlu0 %697
      %699 = vset.pattern.permute.xlu0 0
      %700 = vperm.xlu0 %699, %v296
      %v701 = vpop.permute.xlu0 %700
      %702 = vset.pattern.permute.xlu0 0
      %703 = vperm.xlu0 %702, %v297
      %v704 = vpop.permute.xlu0 %703
      %705 = vset.pattern.permute.xlu0 0
      %706 = vperm.xlu0 %705, %v298
      %v707 = vpop.permute.xlu0 %706
      %708 = vset.pattern.permute.xlu0 0
      %709 = vperm.xlu0 %708, %v299
      %v710 = vpop.permute.xlu0 %709
      %vm711 = vcmp.eq.s32.totalorder %v662, %v665
      %vm712 = vcmp.eq.s32.totalorder %v662, %v668
      %vm713 = vcmp.eq.s32.totalorder %v662, %v671
      %vm714 = vcmp.eq.s32.totalorder %v662, %v674
      %vm715 = vcmp.eq.s32.totalorder %v662, %v677
      %vm716 = vcmp.eq.s32.totalorder %v662, %v680
      %vm717 = vcmp.eq.s32.totalorder %v662, %v683
      %vm718 = vcmp.eq.s32.totalorder %v662, %v686
      %vm719 = vcmp.eq.s32.totalorder %v662, %v689
      %vm720 = vcmp.eq.s32.totalorder %v662, %v692
      %vm721 = vcmp.eq.s32.totalorder %v662, %v695
      %vm722 = vcmp.eq.s32.totalorder %v662, %v698
      %vm723 = vcmp.eq.s32.totalorder %v662, %v701
      %vm724 = vcmp.eq.s32.totalorder %v662, %v704
      %vm725 = vcmp.eq.s32.totalorder %v662, %v707
      %vm726 = vcmp.eq.s32.totalorder %v662, %v710
      %v727 = vsel %vm711, 1, 0
      %v728 = vsel %vm712, 1, 0
      %v729 = vsel %vm713, 1, 0
      %v730 = vsel %vm714, 1, 0
      %v731 = vsel %vm715, 1, 0
      %v732 = vsel %vm716, 1, 0
      %v733 = vsel %vm717, 1, 0
      %v734 = vsel %vm718, 1, 0
      %v735 = vsel %vm719, 1, 0
      %v736 = vsel %vm720, 1, 0
      %v737 = vsel %vm721, 1, 0
      %v738 = vsel %vm722, 1, 0
      %v739 = vsel %vm723, 1, 0
      %v740 = vsel %vm724, 1, 0
      %v741 = vsel %vm725, 1, 0
      %v742 = vsel %vm726, 1, 0
      %v743 = vcvt.s32.f32 %v727
      %v744 = vcvt.s32.f32 %v728
      %v745 = vcvt.s32.f32 %v729
      %v746 = vcvt.s32.f32 %v730
      %v747 = vcvt.s32.f32 %v731
      %v748 = vcvt.s32.f32 %v732
      %v749 = vcvt.s32.f32 %v733
      %v750 = vcvt.s32.f32 %v734
      %v751 = vcvt.s32.f32 %v735
      %v752 = vcvt.s32.f32 %v736
      %v753 = vcvt.s32.f32 %v737
      %v754 = vcvt.s32.f32 %v738
      %v755 = vcvt.s32.f32 %v739
      %v756 = vcvt.s32.f32 %v740
      %v757 = vcvt.s32.f32 %v741
      %v758 = vcvt.s32.f32 %v742
      %v759 = vmul.f32 %v743, %v439
      %v760 = vmul.f32 %v744, %v442
      %v761 = vmul.f32 %v745, %v447
      %v762 = vmul.f32 %v746, %v450
      %v763 = vmul.f32 %v747, %v455
      %v764 = vmul.f32 %v748, %v458
      %v765 = vmul.f32 %v749, %v463
      %v766 = vmul.f32 %v750, %v466
      %v767 = vmul.f32 %v751, %v471
      %v768 = vmul.f32 %v752, %v474
      %v769 = vmul.f32 %v753, %v479
      %v770 = vmul.f32 %v754, %v482
      %v771 = vmul.f32 %v755, %v487
      %v772 = vmul.f32 %v756, %v490
      %v773 = vmul.f32 %v757, %v495
      %v774 = vmul.f32 %v758, %v498
      %775 = vadd.xlane.f32.xlu0 %v759
      %v776 = vpop.xlane.xlu0 %775
      %777 = vadd.xlane.f32.xlu0 %v760
      %v778 = vpop.xlane.xlu0 %777
      %779 = vadd.xlane.f32.xlu0 %v761
      %v780 = vpop.xlane.xlu0 %779
      %781 = vadd.xlane.f32.xlu0 %v762
      %v782 = vpop.xlane.xlu0 %781
      %783 = vadd.xlane.f32.xlu0 %v763
      %v784 = vpop.xlane.xlu0 %783
      %785 = vadd.xlane.f32.xlu0 %v764
      %v786 = vpop.xlane.xlu0 %785
      %787 = vadd.xlane.f32.xlu0 %v765
      %v788 = vpop.xlane.xlu0 %787
      %789 = vadd.xlane.f32.xlu0 %v766
      %v790 = vpop.xlane.xlu0 %789
      %791 = vadd.xlane.f32.xlu0 %v767
      %v792 = vpop.xlane.xlu0 %791
      %793 = vadd.xlane.f32.xlu0 %v768
      %v794 = vpop.xlane.xlu0 %793
      %795 = vadd.xlane.f32.xlu0 %v769
      %v796 = vpop.xlane.xlu0 %795
      %797 = vadd.xlane.f32.xlu0 %v770
      %v798 = vpop.xlane.xlu0 %797
      %799 = vadd.xlane.f32.xlu0 %v771
      %v800 = vpop.xlane.xlu0 %799
      %801 = vadd.xlane.f32.xlu0 %v772
      %v802 = vpop.xlane.xlu0 %801
      %803 = vadd.xlane.f32.xlu0 %v773
      %v804 = vpop.xlane.xlu0 %803
      %805 = vadd.xlane.f32.xlu0 %v774
      %v806 = vpop.xlane.xlu0 %805
      %v807 = vsub.f32 %v645, %v776
      %v808 = vsub.f32 %v646, %v778
      %v809 = vsub.f32 %v647, %v780
      %v810 = vsub.f32 %v648, %v782
      %v811 = vsub.f32 %v649, %v784
      %v812 = vsub.f32 %v650, %v786
      %v813 = vsub.f32 %v651, %v788
      %v814 = vsub.f32 %v652, %v790
      %v815 = vsub.f32 %v653, %v792
      %v816 = vsub.f32 %v654, %v794
      %v817 = vsub.f32 %v655, %v796
      %v818 = vsub.f32 %v656, %v798
      %v819 = vsub.f32 %v657, %v800
      %v820 = vsub.f32 %v658, %v802
      %v821 = vsub.f32 %v659, %v804
      %v822 = vsub.f32 %v660, %v806
      %v823 = vmul.f32 %v807, %v300
      %v824 = vmul.f32 %v808, %v301
      %v825 = vmul.f32 %v809, %v302
      %v826 = vmul.f32 %v810, %v303
      %v827 = vmul.f32 %v811, %v304
      %v828 = vmul.f32 %v812, %v305
      %v829 = vmul.f32 %v813, %v306
      %v830 = vmul.f32 %v814, %v307
      %v831 = vmul.f32 %v815, %v308
      %v832 = vmul.f32 %v816, %v309
      %v833 = vmul.f32 %v817, %v310
      %v834 = vmul.f32 %v818, %v311
      %v835 = vmul.f32 %v819, %v312
      %v836 = vmul.f32 %v820, %v313
      %v837 = vmul.f32 %v821, %v314
      %v838 = vmul.f32 %v822, %v315
      %vm839 = vcmask 7168
      %v840 = vsel %vm839, %v823, 0.0
      %v841 = vsel %vm839, %v824, 0.0
      %v842 = vadd.f32 %v840, %v841
      %v843 = vsel %vm839, %v825, 0.0
      %v844 = vadd.f32 %v842, %v843
      %v845 = vsel %vm839, %v826, 0.0
      %v846 = vadd.f32 %v844, %v845
      %v847 = vsel %vm839, %v827, 0.0
      %v848 = vadd.f32 %v846, %v847
      %v849 = vsel %vm839, %v828, 0.0
      %v850 = vadd.f32 %v848, %v849
      %v851 = vsel %vm839, %v829, 0.0
      %v852 = vadd.f32 %v850, %v851
      %v853 = vsel %vm839, %v830, 0.0
      %v854 = vadd.f32 %v852, %v853
      %v855 = vsel %vm839, %v831, 0.0
      %v856 = vadd.f32 %v854, %v855
      %v857 = vsel %vm839, %v832, 0.0
      %v858 = vadd.f32 %v856, %v857
      %v859 = vsel %vm839, %v833, 0.0
      %v860 = vadd.f32 %v858, %v859
      %v861 = vsel %vm839, %v834, 0.0
      %v862 = vadd.f32 %v860, %v861
      %v863 = vsel %vm839, %v835, 0.0
      %v864 = vadd.f32 %v862, %v863
      %v865 = vsel %vm839, %v836, 0.0
      %v866 = vadd.f32 %v864, %v865
      %v867 = vsel %vm839, %v837, 0.0
      %v868 = vadd.f32 %v866, %v867
      %v869 = vsel %vm839, %v838, 0.0
      %v870 = vadd.f32 %v868, %v869
      %871 = vadd.xlane.f32.xlu0 %v870
      %v872 = vpop.xlane.xlu0 %871
      %v873 = vrot.slane %v872, 4
      %v874 = vadd.f32 %v872, %v873
      %v875 = vrot.slane %v874, 2
      %v876 = vadd.f32 %v874, %v875
      %v877 = vrot.slane %v876, 1
      %v878 = vadd.f32 %v876, %v877
      %s879 = vtos %v878
      %v880 = vstv %s879
      %881 = vst [vmem:[%s266] sm:$0x1] %v880
      %p882 = scmp.lt.s32.totalorder %s16, 1
      %s883 = scalar_select %p882, %s16, 1
      %s884 = scalar_lea.vmem %s5, %s883
      // Predicated region
      $region41: #{_windows_lls.1} parent=39 // pred_check
        %p885 = pneg %p154
      $region42: #{_windows_lls.1} parent=39 // pred_check_branch
        %887 = sbr.rel (%p885) target = $region44
      $region43: #{_windows_lls.1} parent=39 // pred_region
        _
      $region44: #{_windows_lls.1} parent=39 // pred_fallthru
        _
    $region40: #{_windows_lls.1} parent=5 // pred_fallthru
      _
    %p888 = scmp.le.s32.totalorder 2, %s11
    // Predicated region
    $region45: #{_windows_lls.1} parent=5 // pred_check
      %p889 = pneg %p888
    $region46: #{_windows_lls.1} parent=5 // pred_check_branch
      %891 = sbr.rel (%p889) target = $region48
    $region47: #{_windows_lls.1} parent=5 // pred_region
      %s892 = ssub.s32 %s11, 2
      // Predicated region
      $region49: #{_windows_lls.1} parent=47 // pred_check
        %p893 = pneg %p160
      $region50: #{_windows_lls.1} parent=47 // pred_check_branch
        %895 = sbr.rel (%p893) target = $region52
      $region51: #{_windows_lls.1} parent=47 // pred_region
        %p896 = scmp.lt.s32.totalorder %s17, 1
        %s897 = scalar_select %p896, %s17, 1
        %s898 = scalar_lea.vmem %s5, %s897
      $region52: #{_windows_lls.1} parent=47 // pred_fallthru
        _
    $region48: #{_windows_lls.1} parent=5 // pred_fallthru
      _
  $region6: #{_windows_lls.1} parent=0 // loop_footer
    %s15 = sadd.s32 1, %s11
  $region7: #{_windows_lls.1} parent=0 // loop_footer_branch
    %10 = sbr.rel target = $region3
  $region8: #{_windows_lls.1} parent=0 // loop_exit
    _

</llo_original>
